<compile_context>
chip_gen: v5e
topology: v5e:2x2
jax: 0.10.0
libtpu: 0.0.40
codegen_flags: <defaults>
</compile_context>

<pallas_src>
import jax
import jax.numpy as jnp
from jax import lax
from jax.experimental import pallas as pl
from jax.experimental.pallas import tpu as pltpu


def _converge_kernel(p_ref, w_ref, b_ref, o_ref):
    # p_ref: (1, GK, HW)   bf16 im2col patches for this batch element
    # w_ref: (Cout, GK)    bf16 block-diagonal grouped-conv weight (grid invariant)
    # b_ref: (Cout, 1)     f32 bias (grid invariant)
    # o_ref: (1, Cout, HW) f32 conv output, lane-dense (HW is a multiple of 128)
    acc = jnp.dot(w_ref[...], p_ref[0], preferred_element_type=jnp.float32)
    acc = acc + b_ref[...]                       # (Cout, 1) lane broadcast
    o_ref[...] = acc[None].astype(o_ref.dtype)


def converge_head_forward(x, weight, bias, *, in_dim, up_ratio, kernel_size,
                          padding, num_joints):
    """x: (N, in_dim*num_joints, H, W) float32
       weight: (num_joints*up_ratio**2, in_dim, K, K)  (PyTorch grouped-conv layout)
       bias:   (num_joints*up_ratio**2,)
       returns (N, num_joints, H*up_ratio, W*up_ratio)"""
    N, C, H, W = x.shape
    K = kernel_size
    p = padding
    r = up_ratio
    r2 = r * r
    G = num_joints
    assert C == in_dim * G
    HW = H * W
    GK = G * in_dim * K * K
    Cout = G * r2

    # bf16 operands for the MXU; accumulation stays f32 inside the kernel.
    x_bf = x.astype(jnp.bfloat16)
    w_bf = weight.astype(jnp.bfloat16)

    # --- wrapper-side im2col (XLA glue) -> lane-dense (N, G*in_dim*K*K, H*W)
    x_pad = jnp.pad(x_bf, ((0, 0), (0, 0), (p, p), (p, p)))
    taps = [x_pad[:, :, kh:kh + H, kw:kw + W]          # each (N, C, H, W)
            for kh in range(K) for kw in range(K)]
    patches = jnp.stack(taps, axis=2)                  # (N, C, K*K, H, W)
    patches = patches.reshape(N, G, in_dim, K * K, H, W)
    patches = patches.reshape(N, GK, HW)               # tap index = i*K*K + kh*K + kw

    # --- block-diagonal weight (merges all groups into a single matmul)
    w_flat = w_bf.reshape(G, r2, in_dim * K * K)        # per-group (r2, in_dim*K*K)
    eye = jnp.eye(G, dtype=w_bf.dtype)
    w_bd = (eye[:, None, :, None] * w_flat[:, :, None, :]).reshape(Cout, GK)

    b_col = bias.astype(jnp.float32).reshape(Cout, 1)

    conv_out = pl.pallas_call(
        _converge_kernel,
        out_shape=jax.ShapeDtypeStruct((N, Cout, HW), jnp.float32),
        grid_spec=pltpu.PrefetchScalarGridSpec(
            num_scalar_prefetch=0,
            grid=(N,),
            in_specs=[
                pl.BlockSpec((1, GK, HW), lambda n: (n, 0, 0)),
                pl.BlockSpec((Cout, GK), lambda n: (0, 0)),   # constant -> DMA'd once
                pl.BlockSpec((Cout, 1), lambda n: (0, 0)),    # constant -> DMA'd once
            ],
            out_specs=pl.BlockSpec((1, Cout, HW), lambda n: (n, 0, 0)),
        ),
        compiler_params=pltpu.CompilerParams(
            dimension_semantics=("parallel",)),               # N=2 -> both v7x TCs
    )(patches, w_bd, b_col)

    # --- pixel_shuffle(up_ratio): (N, G*r2, H*W) -> (N, G, H*r, W*r)  (glue)
    hp = conv_out.reshape(N, G, r, r, H, W)
    hp = hp.transpose(0, 1, 4, 2, 5, 3)
    return hp.reshape(N, G, H * r, W * r)


def _reference_forward(x, weight, bias, *, up_ratio, padding, num_joints):
    """Pure-JAX reference (lax grouped conv + pixel shuffle)."""
    p = padding
    r = up_ratio
    conv = lax.conv_general_dilated(
        x, weight, window_strides=(1, 1), padding=[(p, p), (p, p)],
        dimension_numbers=("NCHW", "OIHW", "NCHW"),
        feature_group_count=num_joints,
        precision=lax.Precision.HIGHEST)
    conv = conv + bias[None, :, None, None]
    N, Cout, H, W = conv.shape
    G = num_joints
    hp = conv.reshape(N, G, r, r, H, W).transpose(0, 1, 4, 2, 5, 3)
    return hp.reshape(N, G, H * r, W * r)


if __name__ == "__main__":
    # Small, module-consistent shapes.
    in_dim = 4
    up_ratio = 2
    kernel_size = 3
    padding = 1
    num_joints = 4
    N, H, W = 2, 16, 16

    C_in = in_dim * num_joints            # 16
    C_out = up_ratio ** 2 * num_joints    # 16

    key = jax.random.PRNGKey(0)
    kx, kw = jax.random.split(key)
    x = jax.random.normal(kx, (N, C_in, H, W), dtype=jnp.float32)

    # Deterministic init matching the module: weight ~ N(0, 0.001), bias = 0.
    weight = 0.001 * jax.random.normal(
        kw, (C_out, in_dim, kernel_size, kernel_size), dtype=jnp.float32)
    bias = jnp.zeros((C_out,), dtype=jnp.float32)

    out = converge_head_forward(
        x, weight, bias, in_dim=in_dim, up_ratio=up_ratio,
        kernel_size=kernel_size, padding=padding, num_joints=num_joints)
    out = jax.block_until_ready(out)

    # Reference uses the same bf16-quantized operands (the kernel computes the
    # matmul in bf16 with f32 accumulation), so the comparison isolates the
    # kernel math; the only deviation from pure-f32 is the bf16 input cast.
    x_q = x.astype(jnp.bfloat16).astype(jnp.float32)
    w_q = weight.astype(jnp.bfloat16).astype(jnp.float32)
    ref = _reference_forward(
        x_q, w_q, bias, up_ratio=up_ratio, padding=padding,
        num_joints=num_joints)

    assert out.shape == (N, num_joints, H * up_ratio, W * up_ratio), out.shape
    assert jnp.allclose(out, ref, atol=1e-5, rtol=1e-5), "mismatch vs reference"
    print("KERNEL_OK")
</pallas_src>

<mosaic_0001>
module attributes {stable_mosaic.version = 11 : i64} {
  func.func @_converge_kernel(%arg0: i32, %arg1: memref<1x144x256xbf16, #tpu.memory_space<vmem>>, %arg2: memref<16x144xbf16, #tpu.memory_space<vmem>>, %arg3: memref<16x1xf32, #tpu.memory_space<vmem>>, %arg4: memref<1x16x256xf32, #tpu.memory_space<vmem>>) attributes {dimension_semantics = [#tpu.dimension_semantics<parallel>], iteration_bounds = array<i64: 2>, scalar_prefetch = 0 : i64, scratch_operands = 0 : i64, tpu.core_type = #tpu.core_type<tc>, window_params = [{transform_indices = @transform_0, window_bounds = array<i64: 1, 144, 256>}, {pipeline_mode = #tpu.pipeline_mode<synchronous>, transform_indices = @transform_1, window_bounds = array<i64: 16, 144>}, {pipeline_mode = #tpu.pipeline_mode<synchronous>, transform_indices = @transform_2, window_bounds = array<i64: 16, 1>}, {transform_indices = @transform_3, window_bounds = array<i64: 1, 16, 256>}]} {
    %c0 = arith.constant 0 : index
    %c0_0 = arith.constant 0 : index
    %0 = vector.load %arg2[%c0, %c0_0] : memref<16x144xbf16, #tpu.memory_space<vmem>>, vector<16x144xbf16>
    %c0_1 = arith.constant 0 : index
    %c0_2 = arith.constant 0 : index
    %c0_3 = arith.constant 0 : index
    %1 = vector.load %arg1[%c0_1, %c0_2, %c0_3] : memref<1x144x256xbf16, #tpu.memory_space<vmem>>, vector<1x144x256xbf16>
    %2 = vector.shape_cast %1 : vector<1x144x256xbf16> to vector<144x256xbf16>
    %cst = arith.constant dense<0.000000e+00> : vector<16x256xf32>
    %3 = tpu.matmul %0, %2, %cst {dimension_numbers = #tpu.dot_dimension_numbers<[1], [0], [0], [1], [0, 0, 1, 1], [], []>} : vector<16x144xbf16>, vector<144x256xbf16>, vector<16x256xf32> -> vector<16x256xf32>
    %c0_4 = arith.constant 0 : index
    %c0_5 = arith.constant 0 : index
    %4 = vector.load %arg3[%c0_4, %c0_5] : memref<16x1xf32, #tpu.memory_space<vmem>>, vector<16x1xf32>
    %5 = vector.broadcast %4 : vector<16x1xf32> to vector<16x256xf32>
    %6 = arith.addf %3, %5 : vector<16x256xf32>
    %7 = vector.shape_cast %6 : vector<16x256xf32> to vector<1x16x256xf32>
    %c0_6 = arith.constant 0 : index
    %c0_7 = arith.constant 0 : index
    %c0_8 = arith.constant 0 : index
    %8 = vector.load %arg4[%c0_6, %c0_7, %c0_8] : memref<1x16x256xf32, #tpu.memory_space<vmem>>, vector<1x16x256xf32>
    tpu.vector_store %arg4[%c0_6, %c0_7, %c0_8], %7 {strides = array<i32>} : memref<1x16x256xf32, #tpu.memory_space<vmem>>, vector<1x16x256xf32>,
    return
  }
  func.func @transform_0(%arg0: i32) -> (i32, i32, i32) {
    %c0_i32 = arith.constant 0 : i32
    %c0_i32_0 = arith.constant 0 : i32
    %c0_i32_1 = arith.constant 0 : i32
    return %arg0, %c0_i32, %c0_i32_0 : i32, i32, i32
  }
  func.func @transform_1(%arg0: i32) -> (i32, i32) {
    %c0_i32 = arith.constant 0 : i32
    %c0_i32_0 = arith.constant 0 : i32
    %c0_i32_1 = arith.constant 0 : i32
    return %c0_i32, %c0_i32_0 : i32, i32
  }
  func.func @transform_2(%arg0: i32) -> (i32, i32) {
    %c0_i32 = arith.constant 0 : i32
    %c0_i32_0 = arith.constant 0 : i32
    %c0_i32_1 = arith.constant 0 : i32
    return %c0_i32, %c0_i32_0 : i32, i32
  }
  func.func @transform_3(%arg0: i32) -> (i32, i32, i32) {
    %c0_i32 = arith.constant 0 : i32
    %c0_i32_0 = arith.constant 0 : i32
    %c0_i32_1 = arith.constant 0 : i32
    return %arg0, %c0_i32, %c0_i32_0 : i32, i32, i32
  }
}

</mosaic_0001>

<llo_original>
// kernel: tpu_custom_call.1
$region0: #{tpu_custom_call.1}
  #allocation0 [shape = 'u32[]', space=smem, size = 0x4, offset = 0x4, fixed_abs, tag = 'smem constant byte address 0x4 - core index']
  #allocation1 [shape = 'u32[72,128]{1,0:T(1,128)}', space=vmem, size = 0x9000, scoped, tag = 'internal scratch']
  %s0 = inlined_call_operand.hbm [shape: bf16[2,144,256], index: 0, kind: input, shape index: {}]
  %s1 = inlined_call_operand.vmem [shape: bf16[16,144], index: 1, kind: input, shape index: {}]
  %s2 = inlined_call_operand.vmem [shape: f32[16,1], index: 2, kind: input, shape index: {}]
  %s3 = inlined_call_operand.hbm [shape: f32[2,16,256], index: 3, kind: output, shape index: {}]
  %s4 = sld [smem:[#allocation0]]
  $region49: #{tpu_custom_call.1} parent=0
    _
  %s6 = ssub.s32 1, %s4
  %s7 = scalar_select 0, %s6, %s4
  $region1: #{tpu_custom_call.1} parent=0
    #allocation2 [shape = 'u8[147456]{0}', space=vmem, size = 0x24000, scoped, tag = 'input window, operand 0']
    #allocation3 [shape = 's32[2]{0}', space=sflag, size = 0x8, scoped, tag = 'scoped memory for tpu_custom_call.1']
    #allocation4 [shape = 's32[2]{0}', space=sflag, size = 0x8, scoped, tag = 'scoped memory for tpu_custom_call.1']
    #allocation5 [shape = 'u8[32768]{0}', space=vmem, size = 0x8000, scoped, tag = 'output window, operand 0']
    %8 = vsyncpa [#allocation3], 0
    %s9 = scalar_lea.sflag [#allocation3], 1
    %10 = vsyncpa %s9, 0
    %11 = vsyncpa [#allocation4], 0
    %s12 = scalar_lea.sflag [#allocation4], 1
    %13 = vsyncpa %s12, 0
    loop: start=0, step=1, limit=4
    $region2: #{tpu_custom_call.1} parent=1 // loop_pre_header
      _
    $region3: #{tpu_custom_call.1} parent=1 // loop_header
      %s15 = sphi 0, %s19
      %p16 = scmp.ge.s32.totalorder %s15, 4
      %s25 = sphi 0, %s27
      %s28 = sphi 0, %s25
      %s29 = sphi 0, %s28
      %s45 = sphi 0, %s29
      %s49 = sphi 0, %s49
      %s51 = sphi 0, %s49
      %s52 = sphi 0, %s51
      %s66 = sphi 0, %s52
      %s70 = sphi 0, %s70
      %s72 = sphi 0, %s70
      %s73 = sphi 0, %s72
      %s87 = sphi 0, %s73
      %s93 = sphi 0, %s95
      %s96 = sphi 0, %s93
      %s97 = sphi 0, %s96
      %s113 = sphi 0, %s97
    $region4: #{tpu_custom_call.1} parent=1 // loop_header_branch
      %18 = sbr.rel (%p16) target = $region8
    $region5: #{tpu_custom_call.1} parent=1 // loop_body
      %s20 = ssub.s32 %s15, 1
      %s21 = ssub.s32 %s15, 2
      %s22 = sadd.s32 %s15, 1
      %s23 = ssub.s32 %s15, %s22
      %p24 = scmp.eq.s32.totalorder %s23, 0
      %s26 = sadd.s32 %s25, 1
      %s27 = scalar_select %p24, %s25, %s26
      %p30 = pneg %p24
      %p31 = scmp.eq.s32.totalorder %s15, 1
      %p32 = por %p30, %p31
      %p33 = scmp.ne.s32.totalorder %s25, %s28
      %p34 = scmp.eq.s32.totalorder %s15, 0
      %p35 = por %p33, %p34
      %p36 = scmp.ne.s32.totalorder %s25, %s28
      %p37 = scmp.eq.s32.totalorder %s20, 1
      %p38 = por %p36, %p37
      %p39 = scmp.ne.s32.totalorder %s28, %s29
      %p40 = scmp.eq.s32.totalorder %s20, 0
      %p41 = por %p39, %p40
      %p42 = scmp.ne.s32.totalorder %s28, %s29
      %p43 = scmp.eq.s32.totalorder %s21, 1
      %p44 = por %p42, %p43
      %p46 = scmp.ne.s32.totalorder %s29, %s45
      %p47 = scmp.eq.s32.totalorder %s21, 0
      %p48 = por %p46, %p47
      %s50 = sadd.s32 %s49, 1
      %p53 = scmp.eq.s32.totalorder %s15, 1
      %p54 = scmp.ne.s32.totalorder %s49, %s51
      %p55 = scmp.eq.s32.totalorder %s15, 0
      %p56 = por %p54, %p55
      %p57 = scmp.ne.s32.totalorder %s49, %s51
      %p58 = scmp.eq.s32.totalorder %s20, 1
      %p59 = por %p57, %p58
      %p60 = scmp.ne.s32.totalorder %s51, %s52
      %p61 = scmp.eq.s32.totalorder %s20, 0
      %p62 = por %p60, %p61
      %p63 = scmp.ne.s32.totalorder %s51, %s52
      %p64 = scmp.eq.s32.totalorder %s21, 1
      %p65 = por %p63, %p64
      %p67 = scmp.ne.s32.totalorder %s52, %s66
      %p68 = scmp.eq.s32.totalorder %s21, 0
      %p69 = por %p67, %p68
      %s71 = sadd.s32 %s70, 1
      %p74 = scmp.eq.s32.totalorder %s15, 1
      %p75 = scmp.ne.s32.totalorder %s70, %s72
      %p76 = scmp.eq.s32.totalorder %s15, 0
      %p77 = por %p75, %p76
      %p78 = scmp.ne.s32.totalorder %s70, %s72
      %p79 = scmp.eq.s32.totalorder %s20, 1
      %p80 = por %p78, %p79
      %p81 = scmp.ne.s32.totalorder %s72, %s73
      %p82 = scmp.eq.s32.totalorder %s20, 0
      %p83 = por %p81, %p82
      %p84 = scmp.ne.s32.totalorder %s72, %s73
      %p85 = scmp.eq.s32.totalorder %s21, 1
      %p86 = por %p84, %p85
      %p88 = scmp.ne.s32.totalorder %s73, %s87
      %p89 = scmp.eq.s32.totalorder %s21, 0
      %p90 = por %p88, %p89
      %s91 = ssub.s32 %s15, %s22
      %p92 = scmp.eq.s32.totalorder %s91, 0
      %s94 = sadd.s32 %s93, 1
      %s95 = scalar_select %p92, %s93, %s94
      %p98 = pneg %p92
      %p99 = scmp.eq.s32.totalorder %s15, 1
      %p100 = por %p98, %p99
      %p101 = scmp.ne.s32.totalorder %s93, %s96
      %p102 = scmp.eq.s32.totalorder %s15, 0
      %p103 = por %p101, %p102
      %p104 = scmp.ne.s32.totalorder %s93, %s96
      %p105 = scmp.eq.s32.totalorder %s20, 1
      %p106 = por %p104, %p105
      %p107 = scmp.ne.s32.totalorder %s96, %s97
      %p108 = scmp.eq.s32.totalorder %s20, 0
      %p109 = por %p107, %p108
      %p110 = scmp.ne.s32.totalorder %s96, %s97
      %p111 = scmp.eq.s32.totalorder %s21, 1
      %p112 = por %p110, %p111
      %p114 = scmp.ne.s32.totalorder %s97, %s113
      %p115 = scmp.eq.s32.totalorder %s21, 0
      %p116 = por %p114, %p115
      %p117 = scmp.le.s32.totalorder 1, %s15
      %p118 = scmp.lt.s32.totalorder %s15, 3
      %p119 = pnand %p117, %p118
      %p120 = pneg %p119
      // Predicated region
      $region9: #{tpu_custom_call.1} parent=5 // pred_check
        _
      $region10: #{tpu_custom_call.1} parent=5 // pred_check_branch
        %122 = sbr.rel (%p119) target = $region12
      $region11: #{tpu_custom_call.1} parent=5 // pred_region
        %s123 = ssub.s32 %s15, 1
        // Predicated region
        $region13: #{tpu_custom_call.1} parent=11 // pred_check
          %p124 = pneg %p62
        $region14: #{tpu_custom_call.1} parent=11 // pred_check_branch
          %126 = sbr.rel (%p124) target = $region16
        $region15: #{tpu_custom_call.1} parent=11 // pred_region
          _
        $region16: #{tpu_custom_call.1} parent=11 // pred_fallthru
          _
        // Predicated region
        $region17: #{tpu_custom_call.1} parent=11 // pred_check
          %p127 = pneg %p83
        $region18: #{tpu_custom_call.1} parent=11 // pred_check_branch
          %129 = sbr.rel (%p127) target = $region20
        $region19: #{tpu_custom_call.1} parent=11 // pred_region
          _
        $region20: #{tpu_custom_call.1} parent=11 // pred_fallthru
          _
      $region12: #{tpu_custom_call.1} parent=5 // pred_fallthru
        _
      %p130 = scmp.lt.s32.totalorder %s15, 2
      // Predicated region
      $region21: #{tpu_custom_call.1} parent=5 // pred_check
        %p131 = pneg %p130
      $region22: #{tpu_custom_call.1} parent=5 // pred_check_branch
        %133 = sbr.rel (%p131) target = $region24
      $region23: #{tpu_custom_call.1} parent=5 // pred_region
        // Predicated region
        $region25: #{tpu_custom_call.1} parent=23 // pred_check
          %p134 = pneg %p35
        $region26: #{tpu_custom_call.1} parent=23 // pred_check_branch
          %136 = sbr.rel (%p134) target = $region28
        $region27: #{tpu_custom_call.1} parent=23 // pred_region
          %s137 = sand.u32 %s25, 1
          %s138 = scalar_lea.sflag [#allocation3], %s137
          %s139 = sand.u32 %s25, 1
          %s140 = smul.addr %s139, 144
          %s141 = scalar_lea.vmem [#allocation2], %s140
          %143 = vsyncadd %s138, 0
          %s144 = smul.addr %s15, 36
          %s145 = smul.addr %s144, 4
          %s146 = scalar_lea.hbm %s0, %s145
          %s147 = sshll.u32 %s146, 4
          %s148 = int_to_ptr.hbm [resolvable:$true] %s147
          %s149 = sshll.u32 %s141, 4
          %s150 = int_to_ptr.vmem [resolvable:$true] %s149
          %155 = dma.hbm_to_vmem [thread:$0]  %s148, 2304, %s150, %s138, 128, 128, 8
        $region28: #{tpu_custom_call.1} parent=23 // pred_fallthru
          _
      $region24: #{tpu_custom_call.1} parent=5 // pred_fallthru
        _
      %p156 = scmp.le.s32.totalorder 1, %s15
      %p157 = scmp.lt.s32.totalorder %s15, 3
      %p158 = pnand %p156, %p157
      %p159 = pneg %p158
      // Predicated region
      $region29: #{tpu_custom_call.1} parent=5 // pred_check
        _
      $region30: #{tpu_custom_call.1} parent=5 // pred_check_branch
        %161 = sbr.rel (%p158) target = $region32
      $region31: #{tpu_custom_call.1} parent=5 // pred_region
        %s162 = ssub.s32 %s15, 1
        %s163 = sand.u32 %s28, 1
        %s164 = scalar_lea.sflag [#allocation3], %s163
        %s165 = sand.u32 %s28, 1
        %s166 = smul.addr %s165, 144
        %s167 = scalar_lea.vmem [#allocation2], %s166
        // Predicated region
        $region33: #{tpu_custom_call.1} parent=31 // pred_check
          %p168 = pneg %p41
        $region34: #{tpu_custom_call.1} parent=31 // pred_check_branch
          %170 = sbr.rel (%p168) target = $region36
        $region35: #{tpu_custom_call.1} parent=31 // pred_region
          %172 = dma.done %s164, 2304
        $region36: #{tpu_custom_call.1} parent=31 // pred_fallthru
          _
        %s173 = sand.u32 %s28, 1
        %s174 = scalar_lea.sflag [#allocation3], %s173
        %s175 = sand.u32 %s28, 1
        %s176 = smul.addr %s175, 144
        %s177 = scalar_lea.vmem [#allocation2], %s176
        %p178 = pneg %p41
        %p179 = pneg %p38
        %p180 = pneg %p62
        %p181 = pneg %p59
        %p182 = pneg %p83
        %p183 = pneg %p80
        %p184 = pneg %p109
        %p185 = pneg %p106
        %s186 = sand.u32 %s96, 1
        %s187 = scalar_lea.sflag [#allocation4], %s186
        %s188 = sand.u32 %s96, 1
        %s189 = smul.addr %s188, 32
        %s190 = scalar_lea.vmem [#allocation5], %s189
        %v192 = vld [vmem:[%s1] sm:$0xff]
        %v193 = vld [vmem:[%s1 + $0x8] sm:$0xff]
        %v194 = vld [vmem:[%s167] sm:$0xff]
        %v195 = vld [vmem:[%s167 + $0x8] sm:$0xff]
        %v196 = vld [vmem:[%s167 + $0x10] sm:$0xff]
        %v197 = vld [vmem:[%s167 + $0x18] sm:$0xff]
        %v198 = vld [vmem:[%s167 + $0x20] sm:$0xff]
        %v199 = vld [vmem:[%s167 + $0x28] sm:$0xff]
        %v200 = vld [vmem:[%s167 + $0x30] sm:$0xff]
        %v201 = vld [vmem:[%s167 + $0x38] sm:$0xff]
        %v202 = vld [vmem:[%s167 + $0x40] sm:$0xff]
        %v203 = vld [vmem:[%s167 + $0x48] sm:$0xff]
        %v204 = vld [vmem:[%s167 + $0x50] sm:$0xff]
        %v205 = vld [vmem:[%s167 + $0x58] sm:$0xff]
        %v206 = vld [vmem:[%s167 + $0x60] sm:$0xff]
        %v207 = vld [vmem:[%s167 + $0x68] sm:$0xff]
        %v208 = vld [vmem:[%s167 + $0x70] sm:$0xff]
        %v209 = vld [vmem:[%s167 + $0x78] sm:$0xff]
        %v210 = vld [vmem:[%s167 + $0x80] sm:$0xff]
        %v211 = vld [vmem:[%s167 + $0x88] sm:$0xff]
        %v212 = vld [vmem:[%s2] sm:$0xff]
        %v213 = vld [vmem:[%s2 + $0x8] sm:$0xff]
        %215 = vset.pattern.permute.xlu0 0
        %216 = vperm.xlu0 %215, %v212
        %v217 = vpop.permute.xlu0 %216
        %220 = vset.pattern.permute.xlu0 0
        %221 = vperm.xlu0 %220, %v213
        %v222 = vpop.permute.xlu0 %221
        %v226 = vunpack.c.l.b16 %v192
        %v227 = vunpack.c.h.b16 %v192
        %v228 = vunpack.c.l.b16 %v193
        %v229 = vunpack.c.h.b16 %v193
        %v230 = vpack.c.b16 %v228, %v226
        %v231 = vpack.c.b16 %v229, %v227
        %v251 = vunpack.c.l.b16 %v194
        %v252 = vunpack.c.h.b16 %v194
        %v253 = vunpack.c.l.b16 %v195
        %v254 = vunpack.c.h.b16 %v195
        %v255 = vunpack.c.l.b16 %v196
        %v256 = vunpack.c.h.b16 %v196
        %v257 = vunpack.c.l.b16 %v197
        %v258 = vunpack.c.h.b16 %v197
        %v259 = vunpack.c.l.b16 %v198
        %v260 = vunpack.c.h.b16 %v198
        %v261 = vunpack.c.l.b16 %v199
        %v262 = vunpack.c.h.b16 %v199
        %v263 = vunpack.c.l.b16 %v200
        %v264 = vunpack.c.h.b16 %v200
        %v265 = vunpack.c.l.b16 %v201
        %v266 = vunpack.c.h.b16 %v201
        %v267 = vunpack.c.l.b16 %v202
        %v268 = vunpack.c.h.b16 %v202
        %v269 = vunpack.c.l.b16 %v203
        %v270 = vunpack.c.h.b16 %v203
        %v271 = vunpack.c.l.b16 %v204
        %v272 = vunpack.c.h.b16 %v204
        %v273 = vunpack.c.l.b16 %v205
        %v274 = vunpack.c.h.b16 %v205
        %v275 = vunpack.c.l.b16 %v206
        %v276 = vunpack.c.h.b16 %v206
        %v277 = vunpack.c.l.b16 %v207
        %v278 = vunpack.c.h.b16 %v207
        %v279 = vunpack.c.l.b16 %v208
        %v280 = vunpack.c.h.b16 %v208
        %v281 = vunpack.c.l.b16 %v209
        %v282 = vunpack.c.h.b16 %v209
        %v283 = vunpack.c.l.b16 %v210
        %v284 = vunpack.c.h.b16 %v210
        %v285 = vunpack.c.l.b16 %v211
        %v286 = vunpack.c.h.b16 %v211
        %v287 = vpack.c.b16 %v253, %v251
        %v288 = vpack.c.b16 %v254, %v252
        %v289 = vpack.c.b16 %v257, %v255
        %v290 = vpack.c.b16 %v258, %v256
        %v291 = vpack.c.b16 %v261, %v259
        %v292 = vpack.c.b16 %v262, %v260
        %v293 = vpack.c.b16 %v265, %v263
        %v294 = vpack.c.b16 %v266, %v264
        %v295 = vpack.c.b16 %v269, %v267
        %v296 = vpack.c.b16 %v270, %v268
        %v297 = vpack.c.b16 %v273, %v271
        %v298 = vpack.c.b16 %v274, %v272
        %v299 = vpack.c.b16 %v277, %v275
        %v300 = vpack.c.b16 %v278, %v276
        %v301 = vpack.c.b16 %v281, %v279
        %v302 = vpack.c.b16 %v282, %v280
        %v303 = vpack.c.b16 %v285, %v283
        %v304 = vpack.c.b16 %v286, %v284
        %vm323 = vcmask 130048
        %v325 = vsel %vm323, %v231, 0
        %327 = vmatpush.bf16.msra.mxu0 %v301
        %328 = vmatpush.bf16.msra.mxu0 %v299
        %329 = vmatpush.bf16.msra.mxu0 %v297
        %330 = vmatpush.bf16.msra.mxu0 %v295
        %331 = vmatpush.bf16.msra.mxu0 %v293
        %332 = vmatpush.bf16.msra.mxu0 %v291
        %333 = vmatpush.bf16.msra.mxu0 %v289
        %334 = vmatpush.bf16.msra.mxu0 %v287
        %335 = vmatmul.bf16.gmra.mxu0 %v230
        %v336 = vpop.f32.mrf.mxu0
        %v337 = vadd.f32 %v217, %v336
        %v338 = vpop.f32.mrf.mxu0
        %v339 = vadd.f32 %v222, %v338
        %340 = vdwg.mxu0
        %341 = vmatpush.bf16.msra.mxu0 0
        %342 = vmatpush.bf16.msra.mxu0 0
        %343 = vmatpush.bf16.msra.mxu0 0
        %344 = vmatpush.bf16.msra.mxu0 0
        %345 = vmatpush.bf16.msra.mxu0 0
        %346 = vmatpush.bf16.msra.mxu0 0
        %347 = vmatpush.bf16.msra.mxu0 0
        %348 = vmatpush.bf16.msra.mxu0 %v303
        %349 = vmatmul.bf16.gmra.mxu0 %v325
        %v350 = vpop.f32.mrf.mxu0
        %v351 = vadd.f32 %v337, %v350
        %v352 = vpop.f32.mrf.mxu0
        %v353 = vadd.f32 %v339, %v352
        %354 = vdwg.mxu0
        %355 = vmatpush.bf16.msra.mxu0 %v302
        %356 = vmatpush.bf16.msra.mxu0 %v300
        %357 = vmatpush.bf16.msra.mxu0 %v298
        %358 = vmatpush.bf16.msra.mxu0 %v296
        %359 = vmatpush.bf16.msra.mxu0 %v294
        %360 = vmatpush.bf16.msra.mxu0 %v292
        %361 = vmatpush.bf16.msra.mxu0 %v290
        %362 = vmatpush.bf16.msra.mxu0 %v288
        %363 = vmatmul.bf16.gmra.mxu0 %v230
        %v364 = vpop.f32.mrf.mxu0
        %v365 = vadd.f32 %v217, %v364
        %v366 = vpop.f32.mrf.mxu0
        %v367 = vadd.f32 %v222, %v366
        %368 = vdwg.mxu0
        %369 = vmatpush.bf16.msra.mxu0 0
        %370 = vmatpush.bf16.msra.mxu0 0
        %371 = vmatpush.bf16.msra.mxu0 0
        %372 = vmatpush.bf16.msra.mxu0 0
        %373 = vmatpush.bf16.msra.mxu0 0
        %374 = vmatpush.bf16.msra.mxu0 0
        %375 = vmatpush.bf16.msra.mxu0 0
        %376 = vmatpush.bf16.msra.mxu0 %v304
        %377 = vmatmul.bf16.gmra.mxu0 %v325
        %v378 = vpop.f32.mrf.mxu0
        %v379 = vadd.f32 %v365, %v378
        %v380 = vpop.f32.mrf.mxu0
        %v381 = vadd.f32 %v367, %v380
        %382 = vdwg.mxu0
        %383 = vst [vmem:[%s190] sm:$0xff] %v351
        %384 = vst [vmem:[%s190 + $0x8] sm:$0xff] %v379
        %385 = vst [vmem:[%s190 + $0x10] sm:$0xff] %v353
        %386 = vst [vmem:[%s190 + $0x18] sm:$0xff] %v381
        %s387 = sand.u32 %s96, 1
        %s388 = scalar_lea.sflag [#allocation4], %s387
        %s389 = sand.u32 %s96, 1
        %s390 = smul.addr %s389, 32
        %s391 = scalar_lea.vmem [#allocation5], %s390
        // Predicated region
        $region37: #{tpu_custom_call.1} parent=31 // pred_check
          %p392 = pneg %p106
        $region38: #{tpu_custom_call.1} parent=31 // pred_check_branch
          %394 = sbr.rel (%p392) target = $region40
        $region39: #{tpu_custom_call.1} parent=31 // pred_region
          %396 = vsyncadd %s388, 0
          %s397 = smul.addr %s20, 4
          %s398 = smul.addr %s397, 8
          %s399 = scalar_lea.hbm %s3, %s398
          %s400 = sshll.u32 %s391, 4
          %s401 = int_to_ptr.vmem [resolvable:$true] %s400
          %s402 = sshll.u32 %s399, 4
          %s403 = int_to_ptr.hbm [resolvable:$true] %s402
          %408 = dma.vmem_to_hbm [thread:$0]  %s401, 512, %s403, %s388, 256, 256, 16
        $region40: #{tpu_custom_call.1} parent=31 // pred_fallthru
          _
      $region32: #{tpu_custom_call.1} parent=5 // pred_fallthru
        _
      %p409 = scmp.le.s32.totalorder 2, %s15
      // Predicated region
      $region41: #{tpu_custom_call.1} parent=5 // pred_check
        %p410 = pneg %p409
      $region42: #{tpu_custom_call.1} parent=5 // pred_check_branch
        %412 = sbr.rel (%p410) target = $region44
      $region43: #{tpu_custom_call.1} parent=5 // pred_region
        %s413 = ssub.s32 %s15, 2
        // Predicated region
        $region45: #{tpu_custom_call.1} parent=43 // pred_check
          %p414 = pneg %p112
        $region46: #{tpu_custom_call.1} parent=43 // pred_check_branch
          %416 = sbr.rel (%p414) target = $region48
        $region47: #{tpu_custom_call.1} parent=43 // pred_region
          %s417 = sand.u32 %s97, 1
          %s418 = scalar_lea.sflag [#allocation4], %s417
          %s419 = sand.u32 %s97, 1
          %s420 = smul.addr %s419, 32
          %s421 = scalar_lea.vmem [#allocation5], %s420
          %423 = dma.done %s418, 512
        $region48: #{tpu_custom_call.1} parent=43 // pred_fallthru
          _
      $region44: #{tpu_custom_call.1} parent=5 // pred_fallthru
        _
    $region6: #{tpu_custom_call.1} parent=1 // loop_footer
      %s19 = sadd.s32 1, %s15
    $region7: #{tpu_custom_call.1} parent=1 // loop_footer_branch
      %14 = sbr.rel target = $region3
    $region8: #{tpu_custom_call.1} parent=1 // loop_exit
      _
    %424 = vsyncpa [#allocation3], 1
    %s425 = scalar_lea.sflag [#allocation3], 1
    %426 = vsyncpa %s425, 1
    %427 = vsyncpa [#allocation4], 1
    %s428 = scalar_lea.sflag [#allocation4], 1
    %429 = vsyncpa %s428, 1

</llo_original>
